<compile_context>
chip_gen: v5e
topology: v5e:2x2
jax: 0.10.0
libtpu: 0.0.40
codegen_flags: <defaults>
</compile_context>

<pallas_src>
import functools

import jax
import jax.numpy as jnp
from jax import lax
from jax.experimental import pallas as pl
from jax.experimental.pallas import tpu as pltpu

ALPHA = 0.3
BETA = 0.7
SMOOTH = 1.0


def _tversky_stats_kernel(x_ref, y_ref, tp_ref, sp_ref, *,
                          n_valid, rows_per_part, needs_mask):
    # x_ref: (C, T, 128) logits; y_ref: (1, T, 128) integer labels.
    # tp_ref/sp_ref: (C, 128) f32 lane-dense accumulators, resident across the
    # inner (reduction) grid axis; one independent block per (batch, part).
    @pl.when(pl.program_id(2) == 0)
    def _():
        tp_ref[...] = jnp.zeros_like(tp_ref)
        sp_ref[...] = jnp.zeros_like(sp_ref)

    logits = x_ref[...].astype(jnp.float32)                # (C, T, 128)
    C, T, _ = logits.shape

    # softmax over the channel axis (axis 0) — matches softmax_helper(dim=1).
    # With the lane-dense layout this is vreg-wise VPU work plus one EUP exp.
    m = jnp.max(logits, axis=0, keepdims=True)              # (1, T, 128)
    e = jnp.exp(logits - m)                                  # (C, T, 128)
    s = jnp.sum(e, axis=0, keepdims=True)                    # (1, T, 128)
    # Exact reciprocal (only 1/C of elements touch it).  pl.reciprocal(...,
    # approx=True) is a further option if the accuracy budget allows.
    p = e * pl.reciprocal(s)                                 # (C, T, 128)

    labels = y_ref[...].astype(jnp.int32)                    # (1, T, 128)
    ch = lax.broadcasted_iota(jnp.int32, logits.shape, 0)    # channel ids
    onehot = labels == ch                                     # (C, T, 128) bool

    if needs_mask:  # static branch: only emitted for padded / ragged spatial tails
        row = (pl.program_id(1) * rows_per_part + pl.program_id(2) * T
               + lax.broadcasted_iota(jnp.int32, (1, T, 128), 1))
        col = lax.broadcasted_iota(jnp.int32, (1, T, 128), 2)
        valid = row * 128 + col < n_valid                     # (1, T, 128)
        # Masking p alone is sufficient: tp uses where(onehot, p, 0) below and
        # the label histogram is computed wrapper-side from the unpadded labels.
        p = jnp.where(valid, p, 0.0)

    # Lane-dense partial sums; the final cross-lane reduce is deferred to the
    # wrapper (avoids per-tile XLU relayouts + masked (1,1,C) stores).
    tp_ref[...] += jnp.sum(jnp.where(onehot, p, 0.0), axis=1)   # (C, 128)
    sp_ref[...] += jnp.sum(p, axis=1)                            # (C, 128)


def tversky_loss(x, y, *, alpha=ALPHA, beta=BETA, smooth=SMOOTH, max_rows=None):
    """x: (B, C, H, W) float logits; y: (B, 1, H, W) integer labels (any int dtype)."""
    B, C, H, W = x.shape
    HW = H * W
    R = pl.cdiv(HW, 128)          # rows of 128 lanes
    HW_pad = R * 128

    x3 = x.reshape(B, C, HW)
    y3 = y.reshape(B, 1, HW)      # labels stay in their original (narrow) dtype
    if HW_pad != HW:
        # Pad the flattened spatial axis up to the 128-lane width; the padded
        # columns are zeroed in-kernel via the lane mask.
        x3 = jnp.pad(x3, ((0, 0), (0, 0), (0, HW_pad - HW)))
        y3 = jnp.pad(y3, ((0, 0), (0, 0), (0, HW_pad - HW)))
    x4 = x3.reshape(B, C, R, 128)
    y4 = y3.reshape(B, 1, R, 128)

    # ---- tile selection: target ~1 MiB of logits per grid step ----
    if max_rows is None:
        max_rows = max(8, ((1 << 20) // (C * 128 * x.dtype.itemsize)) // 8 * 8)
    if R <= max_rows:
        t_rows, num_tiles = R, 1
    else:
        base = max(8, (max_rows // 8) * 8)
        t_rows = base
        d = base
        while d >= max(8, base // 2):      # prefer a divisor of R: no ragged tail
            if R % d == 0:
                t_rows = d
                break
            d -= 8
        num_tiles = pl.cdiv(R, t_rows)
    needs_mask = (num_tiles * t_rows * 128 != HW)

    # Split the spatial axis across two "parallel" parts when B == 1 so both
    # v7x TensorCores get work (no effect on v5e/v6e, where the grid is a loop).
    parts = 2 if (B == 1 and num_tiles >= 2 and num_tiles % 2 == 0
                  and num_tiles * t_rows == R) else 1
    tiles_per_part = num_tiles // parts
    rows_per_part = tiles_per_part * t_rows

    kernel = functools.partial(_tversky_stats_kernel, n_valid=HW,
                               rows_per_part=rows_per_part, needs_mask=needs_mask)

    acc_shape = jax.ShapeDtypeStruct((B, parts, C, 128), jnp.float32)
    acc_spec = pl.BlockSpec((None, None, C, 128), lambda b, p_, i: (b, p_, 0, 0))

    def row_block(b, p_, i):
        return (b, 0, p_ * tiles_per_part + i, 0)

    # Two double-buffered inputs + resident outputs; headroom, capped so the
    # request stays safe on v7x (64 MiB physical / 32 MiB default-scoped VMEM)
    # and explicit on v5e (16 MiB default scoped).
    need = (2 * (C * x.dtype.itemsize + y4.dtype.itemsize) * t_rows * 128
            + 2 * C * 128 * 4)
    vmem_limit = int(min(48 << 20, max(2 * need + (2 << 20), 16 << 20)))

    tp, sp = pl.pallas_call(
        kernel,
        out_shape=(acc_shape, acc_shape),
        grid_spec=pltpu.PrefetchScalarGridSpec(
            num_scalar_prefetch=0,
            grid=(B, parts, tiles_per_part),
            in_specs=[
                pl.BlockSpec((None, C, t_rows, 128), row_block),
                pl.BlockSpec((None, 1, t_rows, 128), row_block),
            ],
            out_specs=(acc_spec, acc_spec),
        ),
        compiler_params=pltpu.CompilerParams(
            dimension_semantics=("parallel", "parallel", "arbitrary"),
            vmem_limit_bytes=vmem_limit),
    )(x4, y4)

    # batch_dice=True: reduce over batch + spatial; finish the deferred lane sum.
    tp = jnp.sum(tp, axis=(0, 1, 3))                    # (C,)
    sp = jnp.sum(sp, axis=(0, 1, 3))                    # (C,) total softmax mass
    # Per-channel label histogram (cheap pass over y only) -> fn = cnt - tp.
    labels_flat = y.reshape(-1).astype(jnp.int32)
    cls = jnp.arange(C, dtype=jnp.int32)
    cnt = jnp.sum((labels_flat[None, :] == cls[:, None]).astype(jnp.float32), axis=1)

    fp = sp - tp                                        # = sum p*(1-onehot)
    fn = cnt - tp                                       # = sum (1-p)*onehot
    tversky = (tp + smooth) / (tp + alpha * fp + beta * fn + smooth)
    return -jnp.mean(tversky)


def _reference_loss(x, y, alpha=ALPHA, beta=BETA, smooth=SMOOTH):
    """Pure-JAX reference mirroring the PyTorch forward (batch_dice, do_bg)."""
    p = jax.nn.softmax(x.astype(jnp.float32), axis=1)
    y_onehot = jax.nn.one_hot(y[:, 0], x.shape[1], axis=1, dtype=jnp.float32)
    axes = (0, 2, 3)
    tp = jnp.sum(p * y_onehot, axes)
    fp = jnp.sum(p * (1.0 - y_onehot), axes)
    fn = jnp.sum((1.0 - p) * y_onehot, axes)
    tversky = (tp + smooth) / (tp + alpha * fp + beta * fn + smooth)
    return -jnp.mean(tversky)


if __name__ == "__main__":
    key = jax.random.PRNGKey(0)
    k = jax.random.split(key, 8)

    # 1) Main check (NCHW logits, (B,1,H,W) labels), lane-aligned HW, single tile.
    B, C, H, W = 2, 4, 16, 16
    x = jax.random.normal(k[0], (B, C, H, W), dtype=jnp.float32)
    y = jax.random.randint(k[1], (B, 1, H, W), 0, C, dtype=jnp.int32)
    loss = jax.block_until_ready(tversky_loss(x, y))
    ref = jax.block_until_ready(_reference_loss(x, y))
    assert jnp.isfinite(loss)
    assert jnp.allclose(loss, ref, rtol=1e-5, atol=1e-6), (loss, ref)

    # 2) Ragged HW (not a multiple of 128): pad + in-kernel lane mask.
    x2 = jax.random.normal(k[2], (B, C, 20, 20), dtype=jnp.float32)
    y2 = jax.random.randint(k[3], (B, 1, 20, 20), 0, C, dtype=jnp.int32)
    loss2 = jax.block_until_ready(tversky_loss(x2, y2))
    ref2 = jax.block_until_ready(_reference_loss(x2, y2))
    assert jnp.isfinite(loss2)
    assert jnp.allclose(loss2, ref2, rtol=1e-5, atol=1e-6), (loss2, ref2)

    # 3) B=1: spatial split across two "parallel" parts (keeps both v7x cores
    #    busy) + multi-tile reduction path.
    x3_ = jax.random.normal(k[4], (1, C, 64, 64), dtype=jnp.float32)
    y3_ = jax.random.randint(k[5], (1, 1, 64, 64), 0, C, dtype=jnp.int32)
    loss3 = jax.block_until_ready(tversky_loss(x3_, y3_, max_rows=8))
    ref3 = jax.block_until_ready(_reference_loss(x3_, y3_))
    assert jnp.isfinite(loss3)
    assert jnp.allclose(loss3, ref3, rtol=1e-5, atol=1e-5), (loss3, ref3)

    # 4) Multi-tile + ragged grid tail (masked) + narrow int8 labels.
    x4_ = jax.random.normal(k[6], (2, C, 36, 36), dtype=jnp.float32)
    y4_ = jax.random.randint(k[7], (2, 1, 36, 36), 0, C, dtype=jnp.int8)
    loss4 = jax.block_until_ready(tversky_loss(x4_, y4_, max_rows=8))
    ref4 = jax.block_until_ready(_reference_loss(x4_, y4_))
    assert jnp.isfinite(loss4)
    assert jnp.allclose(loss4, ref4, rtol=1e-5, atol=1e-5), (loss4, ref4)

    print("KERNEL_OK")
</pallas_src>

<mosaic_0001>
module attributes {stable_mosaic.version = 11 : i64} {
  func.func @_tversky_stats_kernel(%arg0: i32, %arg1: i32, %arg2: i32, %arg3: memref<1x4x2x128xf32, #tpu.memory_space<vmem>>, %arg4: memref<1x1x2x128xi32, #tpu.memory_space<vmem>>, %arg5: memref<1x1x4x128xf32, #tpu.memory_space<vmem>>, %arg6: memref<1x1x4x128xf32, #tpu.memory_space<vmem>>) attributes {dimension_semantics = [#tpu.dimension_semantics<parallel>, #tpu.dimension_semantics<parallel>, #tpu.dimension_semantics<arbitrary>], iteration_bounds = array<i64: 2, 1, 1>, scalar_prefetch = 0 : i64, scratch_operands = 0 : i64, tpu.core_type = #tpu.core_type<tc>, window_params = [{transform_indices = @transform_0, window_bounds = array<i64: 1, 4, 2, 128>}, {transform_indices = @transform_1, window_bounds = array<i64: 1, 1, 2, 128>}, {transform_indices = @transform_2, window_bounds = array<i64: 1, 1, 4, 128>}, {transform_indices = @transform_3, window_bounds = array<i64: 1, 1, 4, 128>}]} {
    %c0_i32 = arith.constant 0 : i32
    %0 = arith.cmpi eq, %arg2, %c0_i32 : i32
    %1 = arith.extui %0 : i1 to i32
    %c0_i32_0 = arith.constant 0 : i32
    %2 = arith.cmpi ne, %1, %c0_i32_0 : i32
    scf.if %2 {
      %cst_28 = arith.constant 0.000000e+00 : f32
      %36 = vector.broadcast %cst_28 : f32 to vector<4x128xf32>
      %c0_29 = arith.constant 0 : index
      %c0_30 = arith.constant 0 : index
      %c0_31 = arith.constant 0 : index
      %c0_32 = arith.constant 0 : index
      %37 = vector.load %arg5[%c0_29, %c0_30, %c0_31, %c0_32] : memref<1x1x4x128xf32, #tpu.memory_space<vmem>>, vector<1x1x4x128xf32>
      %38 = vector.shape_cast %37 : vector<1x1x4x128xf32> to vector<4x128xf32>
      %39 = vector.shape_cast %36 : vector<4x128xf32> to vector<1x1x4x128xf32>
      tpu.vector_store %arg5[%c0_29, %c0_30, %c0_31, %c0_32], %39 {strides = array<i32>} : memref<1x1x4x128xf32, #tpu.memory_space<vmem>>, vector<1x1x4x128xf32>,
      %cst_33 = arith.constant 0.000000e+00 : f32
      %40 = vector.broadcast %cst_33 : f32 to vector<4x128xf32>
      %c0_34 = arith.constant 0 : index
      %c0_35 = arith.constant 0 : index
      %c0_36 = arith.constant 0 : index
      %c0_37 = arith.constant 0 : index
      %41 = vector.load %arg6[%c0_34, %c0_35, %c0_36, %c0_37] : memref<1x1x4x128xf32, #tpu.memory_space<vmem>>, vector<1x1x4x128xf32>
      %42 = vector.shape_cast %41 : vector<1x1x4x128xf32> to vector<4x128xf32>
      %43 = vector.shape_cast %40 : vector<4x128xf32> to vector<1x1x4x128xf32>
      tpu.vector_store %arg6[%c0_34, %c0_35, %c0_36, %c0_37], %43 {strides = array<i32>} : memref<1x1x4x128xf32, #tpu.memory_space<vmem>>, vector<1x1x4x128xf32>,
    } else {
    }
    %c0 = arith.constant 0 : index
    %c0_1 = arith.constant 0 : index
    %c0_2 = arith.constant 0 : index
    %c0_3 = arith.constant 0 : index
    %3 = vector.load %arg3[%c0, %c0_1, %c0_2, %c0_3] : memref<1x4x2x128xf32, #tpu.memory_space<vmem>>, vector<1x4x2x128xf32>
    %4 = vector.shape_cast %3 : vector<1x4x2x128xf32> to vector<4x2x128xf32>
    %cst = arith.constant dense<0xFF800000> : vector<2x128xf32>
    %5 = vector.multi_reduction <maximumf>, %4, %cst [0] : vector<4x2x128xf32> to vector<2x128xf32>
    %6 = vector.shape_cast %5 : vector<2x128xf32> to vector<1x2x128xf32>
    %7 = vector.broadcast %6 : vector<1x2x128xf32> to vector<4x2x128xf32>
    %8 = arith.subf %4, %7 : vector<4x2x128xf32>
    %9 = math.exp %8 : vector<4x2x128xf32>
    %cst_4 = arith.constant dense<0.000000e+00> : vector<2x128xf32>
    %10 = vector.multi_reduction <add>, %9, %cst_4 [0] : vector<4x2x128xf32> to vector<2x128xf32>
    %11 = vector.shape_cast %10 : vector<2x128xf32> to vector<1x2x128xf32>
    %12 = tpu.reciprocal %11 : vector<1x2x128xf32> -> vector<1x2x128xf32>
    %13 = vector.broadcast %12 : vector<1x2x128xf32> to vector<4x2x128xf32>
    %14 = arith.mulf %9, %13 : vector<4x2x128xf32>
    %c0_5 = arith.constant 0 : index
    %c0_6 = arith.constant 0 : index
    %c0_7 = arith.constant 0 : index
    %c0_8 = arith.constant 0 : index
    %15 = vector.load %arg4[%c0_5, %c0_6, %c0_7, %c0_8] : memref<1x1x2x128xi32, #tpu.memory_space<vmem>>, vector<1x1x2x128xi32>
    %16 = vector.shape_cast %15 : vector<1x1x2x128xi32> to vector<1x2x128xi32>
    %17 = tpu.iota {dimensions = array<i32: 0>} : vector<4x2x128xi32>
    %18 = vector.broadcast %16 : vector<1x2x128xi32> to vector<4x2x128xi32>
    %19 = arith.cmpi eq, %18, %17 : vector<4x2x128xi32>
    %c0_9 = arith.constant 0 : index
    %c0_10 = arith.constant 0 : index
    %c0_11 = arith.constant 0 : index
    %c0_12 = arith.constant 0 : index
    %20 = vector.load %arg5[%c0_9, %c0_10, %c0_11, %c0_12] : memref<1x1x4x128xf32, #tpu.memory_space<vmem>>, vector<1x1x4x128xf32>
    %21 = vector.shape_cast %20 : vector<1x1x4x128xf32> to vector<4x128xf32>
    %cst_13 = arith.constant 0.000000e+00 : f32
    %22 = vector.broadcast %cst_13 : f32 to vector<4x2x128xf32>
    %23 = arith.select %19, %14, %22 : vector<4x2x128xi1>, vector<4x2x128xf32>
    %cst_14 = arith.constant dense<0.000000e+00> : vector<4x128xf32>
    %24 = vector.multi_reduction <add>, %23, %cst_14 [1] : vector<4x2x128xf32> to vector<4x128xf32>
    %25 = arith.addf %21, %24 : vector<4x128xf32>
    %c0_15 = arith.constant 0 : index
    %c0_16 = arith.constant 0 : index
    %c0_17 = arith.constant 0 : index
    %c0_18 = arith.constant 0 : index
    %26 = vector.load %arg5[%c0_15, %c0_16, %c0_17, %c0_18] : memref<1x1x4x128xf32, #tpu.memory_space<vmem>>, vector<1x1x4x128xf32>
    %27 = vector.shape_cast %26 : vector<1x1x4x128xf32> to vector<4x128xf32>
    %28 = vector.shape_cast %25 : vector<4x128xf32> to vector<1x1x4x128xf32>
    tpu.vector_store %arg5[%c0_15, %c0_16, %c0_17, %c0_18], %28 {strides = array<i32>} : memref<1x1x4x128xf32, #tpu.memory_space<vmem>>, vector<1x1x4x128xf32>,
    %c0_19 = arith.constant 0 : index
    %c0_20 = arith.constant 0 : index
    %c0_21 = arith.constant 0 : index
    %c0_22 = arith.constant 0 : index
    %29 = vector.load %arg6[%c0_19, %c0_20, %c0_21, %c0_22] : memref<1x1x4x128xf32, #tpu.memory_space<vmem>>, vector<1x1x4x128xf32>
    %30 = vector.shape_cast %29 : vector<1x1x4x128xf32> to vector<4x128xf32>
    %cst_23 = arith.constant dense<0.000000e+00> : vector<4x128xf32>
    %31 = vector.multi_reduction <add>, %14, %cst_23 [1] : vector<4x2x128xf32> to vector<4x128xf32>
    %32 = arith.addf %30, %31 : vector<4x128xf32>
    %c0_24 = arith.constant 0 : index
    %c0_25 = arith.constant 0 : index
    %c0_26 = arith.constant 0 : index
    %c0_27 = arith.constant 0 : index
    %33 = vector.load %arg6[%c0_24, %c0_25, %c0_26, %c0_27] : memref<1x1x4x128xf32, #tpu.memory_space<vmem>>, vector<1x1x4x128xf32>
    %34 = vector.shape_cast %33 : vector<1x1x4x128xf32> to vector<4x128xf32>
    %35 = vector.shape_cast %32 : vector<4x128xf32> to vector<1x1x4x128xf32>
    tpu.vector_store %arg6[%c0_24, %c0_25, %c0_26, %c0_27], %35 {strides = array<i32>} : memref<1x1x4x128xf32, #tpu.memory_space<vmem>>, vector<1x1x4x128xf32>,
    return
  }
  func.func @transform_0(%arg0: i32, %arg1: i32, %arg2: i32) -> (i32, i32, i32, i32) {
    %c1_i32 = arith.constant 1 : i32
    %0 = arith.muli %arg1, %c1_i32 : i32
    %1 = arith.addi %0, %arg2 : i32
    %c0_i32 = arith.constant 0 : i32
    %c0_i32_0 = arith.constant 0 : i32
    %c0_i32_1 = arith.constant 0 : i32
    return %arg0, %c0_i32, %1, %c0_i32_0 : i32, i32, i32, i32
  }
  func.func @transform_1(%arg0: i32, %arg1: i32, %arg2: i32) -> (i32, i32, i32, i32) {
    %c1_i32 = arith.constant 1 : i32
    %0 = arith.muli %arg1, %c1_i32 : i32
    %1 = arith.addi %0, %arg2 : i32
    %c0_i32 = arith.constant 0 : i32
    %c0_i32_0 = arith.constant 0 : i32
    %c0_i32_1 = arith.constant 0 : i32
    return %arg0, %c0_i32, %1, %c0_i32_0 : i32, i32, i32, i32
  }
  func.func @transform_2(%arg0: i32, %arg1: i32, %arg2: i32) -> (i32, i32, i32, i32) {
    %c0_i32 = arith.constant 0 : i32
    %c0_i32_0 = arith.constant 0 : i32
    %c0_i32_1 = arith.constant 0 : i32
    return %arg0, %arg1, %c0_i32, %c0_i32_0 : i32, i32, i32, i32
  }
  func.func @transform_3(%arg0: i32, %arg1: i32, %arg2: i32) -> (i32, i32, i32, i32) {
    %c0_i32 = arith.constant 0 : i32
    %c0_i32_0 = arith.constant 0 : i32
    %c0_i32_1 = arith.constant 0 : i32
    return %arg0, %arg1, %c0_i32, %c0_i32_0 : i32, i32, i32, i32
  }
}

</mosaic_0001>

<llo_original>
// kernel: tpu_custom_call.1
$region0: #{tpu_custom_call.1}
  #allocation0 [shape = 'u32[]', space=smem, size = 0x4, offset = 0x4, fixed_abs, tag = 'smem constant byte address 0x4 - core index']
  #allocation1 [shape = 'u32[72,128]{1,0:T(1,128)}', space=vmem, size = 0x9000, scoped, tag = 'internal scratch']
  %s0 = inlined_call_operand.hbm [shape: f32[2,4,2,128], index: 0, kind: input, shape index: {}]
  %s1 = inlined_call_operand.hbm [shape: s32[2,1,2,128], index: 1, kind: input, shape index: {}]
  %s2 = inlined_call_operand.hbm [shape: f32[2,1,4,128], index: 2, kind: output, shape index: {0}]
  %s3 = inlined_call_operand.hbm [shape: f32[2,1,4,128], index: 3, kind: output, shape index: {1}]
  %4 = xla_tuple %s2, %s3
  %s5 = sld [smem:[#allocation0]]
  $region61: #{tpu_custom_call.1} parent=0
    _
  %s7 = ssub.s32 1, %s5
  %s8 = scalar_select 0, %s7, %s5
  $region1: #{tpu_custom_call.1} parent=0
    #allocation2 [shape = 'u8[8192]{0}', space=vmem, size = 0x2000, scoped, tag = 'input window, operand 0']
    #allocation3 [shape = 's32[2]{0}', space=sflag, size = 0x8, scoped, tag = 'scoped memory for tpu_custom_call.1']
    #allocation4 [shape = 's32[2]{0}', space=sflag, size = 0x8, scoped, tag = 'scoped memory for tpu_custom_call.1']
    #allocation5 [shape = 'u8[2048]{0}', space=vmem, size = 0x800, scoped, tag = 'input window, operand 1']
    #allocation6 [shape = 's32[2]{0}', space=sflag, size = 0x8, scoped, tag = 'scoped memory for tpu_custom_call.1']
    #allocation7 [shape = 'u8[4096]{0}', space=vmem, size = 0x1000, scoped, tag = 'output window, operand 0']
    #allocation8 [shape = 'u8[4096]{0}', space=vmem, size = 0x1000, scoped, tag = 'output window, operand 1']
    #allocation9 [shape = 's32[2]{0}', space=sflag, size = 0x8, scoped, tag = 'scoped memory for tpu_custom_call.1']
    %9 = vsyncpa [#allocation3], 0
    %s10 = scalar_lea.sflag [#allocation3], 1
    %11 = vsyncpa %s10, 0
    %12 = vsyncpa [#allocation6], 0
    %s13 = scalar_lea.sflag [#allocation6], 1
    %14 = vsyncpa %s13, 0
    %15 = vsyncpa [#allocation4], 0
    %s16 = scalar_lea.sflag [#allocation4], 1
    %17 = vsyncpa %s16, 0
    %18 = vsyncpa [#allocation9], 0
    %s19 = scalar_lea.sflag [#allocation9], 1
    %20 = vsyncpa %s19, 0
    loop: start=0, step=1, limit=4
    $region2: #{tpu_custom_call.1} parent=1 // loop_pre_header
      _
    $region3: #{tpu_custom_call.1} parent=1 // loop_header
      %s22 = sphi 0, %s26
      %p23 = scmp.ge.s32.totalorder %s22, 4
      %s29 = sphi 0, %s48
      %s30 = sphi 0, %s44
      %s31 = sphi 0, %s40
      %s32 = sphi 0, %s29
      %s33 = sphi 0, %s30
      %s34 = sphi 0, %s31
      %s35 = sphi 0, %s32
      %s36 = sphi 0, %s33
      %s37 = sphi 0, %s34
      %s55 = sphi 0, %s57
      %s58 = sphi 0, %s55
      %s59 = sphi 0, %s58
      %s75 = sphi 0, %s59
      %s85 = sphi 0, %s87
      %s88 = sphi 0, %s85
      %s89 = sphi 0, %s88
      %s105 = sphi 0, %s89
      %s113 = sphi 0, %s115
      %s116 = sphi 0, %s113
      %s117 = sphi 0, %s116
      %s133 = sphi 0, %s117
      %s141 = sphi 0, %s143
      %s144 = sphi 0, %s141
      %s145 = sphi 0, %s144
      %s161 = sphi 0, %s145
    $region4: #{tpu_custom_call.1} parent=1 // loop_header_branch
      %25 = sbr.rel (%p23) target = $region8
    $region5: #{tpu_custom_call.1} parent=1 // loop_body
      %s27 = ssub.s32 %s22, 1
      %s28 = ssub.s32 %s22, 2
      %s38 = sadd.s32 1, %s31
      %p39 = scmp.ge.s32.totalorder %s38, 1
      %s40 = scalar_select %p39, 0, %s38
      %s41 = sadd.s32 1, %s30
      %s42 = scalar_select %p39, %s41, %s30
      %p43 = scmp.ge.s32.totalorder %s42, 1
      %s44 = scalar_select %p43, 0, %s42
      %s45 = sadd.s32 1, %s29
      %s46 = scalar_select %p43, %s45, %s29
      %p47 = scmp.ge.s32.totalorder %s46, 2
      %s48 = scalar_select %p47, 0, %s46
      %s49 = sadd.s32 %s30, %s31
      %s50 = sadd.s32 %s44, %s40
      %s51 = ssub.s32 %s29, %s48
      %s52 = ssub.s32 %s49, %s50
      %s53 = sor.u32 %s51, %s52
      %p54 = scmp.eq.s32.totalorder %s53, 0
      %s56 = sadd.s32 %s55, 1
      %s57 = scalar_select %p54, %s55, %s56
      %p60 = pneg %p54
      %p61 = scmp.eq.s32.totalorder %s22, 1
      %p62 = por %p60, %p61
      %p63 = scmp.ne.s32.totalorder %s55, %s58
      %p64 = scmp.eq.s32.totalorder %s22, 0
      %p65 = por %p63, %p64
      %p66 = scmp.ne.s32.totalorder %s55, %s58
      %p67 = scmp.eq.s32.totalorder %s27, 1
      %p68 = por %p66, %p67
      %p69 = scmp.ne.s32.totalorder %s58, %s59
      %p70 = scmp.eq.s32.totalorder %s27, 0
      %p71 = por %p69, %p70
      %p72 = scmp.ne.s32.totalorder %s58, %s59
      %p73 = scmp.eq.s32.totalorder %s28, 1
      %p74 = por %p72, %p73
      %p76 = scmp.ne.s32.totalorder %s59, %s75
      %p77 = scmp.eq.s32.totalorder %s28, 0
      %p78 = por %p76, %p77
      %s79 = sadd.s32 %s30, %s31
      %s80 = sadd.s32 %s44, %s40
      %s81 = ssub.s32 %s29, %s48
      %s82 = ssub.s32 %s79, %s80
      %s83 = sor.u32 %s81, %s82
      %p84 = scmp.eq.s32.totalorder %s83, 0
      %s86 = sadd.s32 %s85, 1
      %s87 = scalar_select %p84, %s85, %s86
      %p90 = pneg %p84
      %p91 = scmp.eq.s32.totalorder %s22, 1
      %p92 = por %p90, %p91
      %p93 = scmp.ne.s32.totalorder %s85, %s88
      %p94 = scmp.eq.s32.totalorder %s22, 0
      %p95 = por %p93, %p94
      %p96 = scmp.ne.s32.totalorder %s85, %s88
      %p97 = scmp.eq.s32.totalorder %s27, 1
      %p98 = por %p96, %p97
      %p99 = scmp.ne.s32.totalorder %s88, %s89
      %p100 = scmp.eq.s32.totalorder %s27, 0
      %p101 = por %p99, %p100
      %p102 = scmp.ne.s32.totalorder %s88, %s89
      %p103 = scmp.eq.s32.totalorder %s28, 1
      %p104 = por %p102, %p103
      %p106 = scmp.ne.s32.totalorder %s89, %s105
      %p107 = scmp.eq.s32.totalorder %s28, 0
      %p108 = por %p106, %p107
      %s109 = ssub.s32 %s29, %s48
      %s110 = ssub.s32 %s30, %s44
      %s111 = sor.u32 %s109, %s110
      %p112 = scmp.eq.s32.totalorder %s111, 0
      %s114 = sadd.s32 %s113, 1
      %s115 = scalar_select %p112, %s113, %s114
      %p118 = pneg %p112
      %p119 = scmp.eq.s32.totalorder %s22, 1
      %p120 = por %p118, %p119
      %p121 = scmp.ne.s32.totalorder %s113, %s116
      %p122 = scmp.eq.s32.totalorder %s22, 0
      %p123 = por %p121, %p122
      %p124 = scmp.ne.s32.totalorder %s113, %s116
      %p125 = scmp.eq.s32.totalorder %s27, 1
      %p126 = por %p124, %p125
      %p127 = scmp.ne.s32.totalorder %s116, %s117
      %p128 = scmp.eq.s32.totalorder %s27, 0
      %p129 = por %p127, %p128
      %p130 = scmp.ne.s32.totalorder %s116, %s117
      %p131 = scmp.eq.s32.totalorder %s28, 1
      %p132 = por %p130, %p131
      %p134 = scmp.ne.s32.totalorder %s117, %s133
      %p135 = scmp.eq.s32.totalorder %s28, 0
      %p136 = por %p134, %p135
      %s137 = ssub.s32 %s29, %s48
      %s138 = ssub.s32 %s30, %s44
      %s139 = sor.u32 %s137, %s138
      %p140 = scmp.eq.s32.totalorder %s139, 0
      %s142 = sadd.s32 %s141, 1
      %s143 = scalar_select %p140, %s141, %s142
      %p146 = pneg %p140
      %p147 = scmp.eq.s32.totalorder %s22, 1
      %p148 = por %p146, %p147
      %p149 = scmp.ne.s32.totalorder %s141, %s144
      %p150 = scmp.eq.s32.totalorder %s22, 0
      %p151 = por %p149, %p150
      %p152 = scmp.ne.s32.totalorder %s141, %s144
      %p153 = scmp.eq.s32.totalorder %s27, 1
      %p154 = por %p152, %p153
      %p155 = scmp.ne.s32.totalorder %s144, %s145
      %p156 = scmp.eq.s32.totalorder %s27, 0
      %p157 = por %p155, %p156
      %p158 = scmp.ne.s32.totalorder %s144, %s145
      %p159 = scmp.eq.s32.totalorder %s28, 1
      %p160 = por %p158, %p159
      %p162 = scmp.ne.s32.totalorder %s145, %s161
      %p163 = scmp.eq.s32.totalorder %s28, 0
      %p164 = por %p162, %p163
      %p165 = scmp.le.s32.totalorder 1, %s22
      %p166 = scmp.lt.s32.totalorder %s22, 3
      %p167 = pnand %p165, %p166
      %p168 = pneg %p167
      // Predicated region
      $region9: #{tpu_custom_call.1} parent=5 // pred_check
        _
      $region10: #{tpu_custom_call.1} parent=5 // pred_check_branch
        %170 = sbr.rel (%p167) target = $region12
      $region11: #{tpu_custom_call.1} parent=5 // pred_region
        %s171 = ssub.s32 %s22, 1
      $region12: #{tpu_custom_call.1} parent=5 // pred_fallthru
        _
      %p172 = scmp.lt.s32.totalorder %s22, 2
      // Predicated region
      $region13: #{tpu_custom_call.1} parent=5 // pred_check
        %p173 = pneg %p172
      $region14: #{tpu_custom_call.1} parent=5 // pred_check_branch
        %175 = sbr.rel (%p173) target = $region16
      $region15: #{tpu_custom_call.1} parent=5 // pred_region
        // Predicated region
        $region17: #{tpu_custom_call.1} parent=15 // pred_check
          %p176 = pneg %p65
        $region18: #{tpu_custom_call.1} parent=15 // pred_check_branch
          %178 = sbr.rel (%p176) target = $region20
        $region19: #{tpu_custom_call.1} parent=15 // pred_region
          %s179 = sand.u32 %s55, 1
          %s180 = scalar_lea.sflag [#allocation3], %s179
          %s181 = sand.u32 %s55, 1
          %s182 = smul.addr %s181, 8
          %s183 = scalar_lea.vmem [#allocation2], %s182
          %s184 = sadd.s32 %s30, %s31
          %186 = vsyncadd %s180, 0
          %s187 = smul.addr %s29, 4
          %s188 = sadd.s32 %s184, %s187
          %s189 = smul.addr %s188, 2
          %s190 = scalar_lea.hbm %s0, %s189
          %s191 = sshll.u32 %s190, 4
          %s192 = int_to_ptr.hbm [resolvable:$true] %s191
          %s193 = sshll.u32 %s183, 4
          %s194 = int_to_ptr.vmem [resolvable:$true] %s193
          %199 = dma.hbm_to_vmem [thread:$0]  %s192, 128, %s194, %s180, 32, 32, 2
        $region20: #{tpu_custom_call.1} parent=15 // pred_fallthru
          _
        // Predicated region
        $region21: #{tpu_custom_call.1} parent=15 // pred_check
          %p200 = pneg %p95
        $region22: #{tpu_custom_call.1} parent=15 // pred_check_branch
          %202 = sbr.rel (%p200) target = $region24
        $region23: #{tpu_custom_call.1} parent=15 // pred_region
          %s203 = sand.u32 %s85, 1
          %s204 = scalar_lea.sflag [#allocation6], %s203
          %s205 = sand.u32 %s85, 1
          %s206 = smul.addr %s205, 2
          %s207 = scalar_lea.vmem [#allocation5], %s206
          %s208 = sadd.s32 %s30, %s31
          %210 = vsyncadd %s204, 0
          %s211 = sadd.s32 %s208, %s29
          %s212 = smul.addr %s211, 2
          %s213 = scalar_lea.hbm %s1, %s212
          %s215 = sshll.u32 %s213, 4
          %s216 = int_to_ptr.hbm [resolvable:$true] %s215
          %s217 = sshll.u32 %s207, 4
          %s218 = int_to_ptr.vmem [resolvable:$true] %s217
          %220 = dma.hbm_to_vmem [thread:$0]  %s216, 32, %s218, %s204
        $region24: #{tpu_custom_call.1} parent=15 // pred_fallthru
          _
      $region16: #{tpu_custom_call.1} parent=5 // pred_fallthru
        _
      %p221 = scmp.le.s32.totalorder 1, %s22
      %p222 = scmp.lt.s32.totalorder %s22, 3
      %p223 = pnand %p221, %p222
      %p224 = pneg %p223
      // Predicated region
      $region25: #{tpu_custom_call.1} parent=5 // pred_check
        _
      $region26: #{tpu_custom_call.1} parent=5 // pred_check_branch
        %226 = sbr.rel (%p223) target = $region28
      $region27: #{tpu_custom_call.1} parent=5 // pred_region
        %s227 = ssub.s32 %s22, 1
        %s228 = sand.u32 %s58, 1
        %s229 = scalar_lea.sflag [#allocation3], %s228
        %s230 = sand.u32 %s58, 1
        %s231 = smul.addr %s230, 8
        %s232 = scalar_lea.vmem [#allocation2], %s231
        // Predicated region
        $region29: #{tpu_custom_call.1} parent=27 // pred_check
          %p233 = pneg %p71
        $region30: #{tpu_custom_call.1} parent=27 // pred_check_branch
          %235 = sbr.rel (%p233) target = $region32
        $region31: #{tpu_custom_call.1} parent=27 // pred_region
          %237 = dma.done %s229, 128
        $region32: #{tpu_custom_call.1} parent=27 // pred_fallthru
          _
        %s238 = sand.u32 %s88, 1
        %s239 = scalar_lea.sflag [#allocation6], %s238
        %s240 = sand.u32 %s88, 1
        %s241 = smul.addr %s240, 2
        %s242 = scalar_lea.vmem [#allocation5], %s241
        // Predicated region
        $region33: #{tpu_custom_call.1} parent=27 // pred_check
          %p243 = pneg %p101
        $region34: #{tpu_custom_call.1} parent=27 // pred_check_branch
          %245 = sbr.rel (%p243) target = $region36
        $region35: #{tpu_custom_call.1} parent=27 // pred_region
          %247 = dma.done %s239, 32
        $region36: #{tpu_custom_call.1} parent=27 // pred_fallthru
          _
        %s248 = sand.u32 %s58, 1
        %s249 = scalar_lea.sflag [#allocation3], %s248
        %s250 = sand.u32 %s58, 1
        %s251 = smul.addr %s250, 8
        %s252 = scalar_lea.vmem [#allocation2], %s251
        %p253 = pneg %p71
        %p254 = pneg %p68
        %s255 = sand.u32 %s88, 1
        %s256 = scalar_lea.sflag [#allocation6], %s255
        %s257 = sand.u32 %s88, 1
        %s258 = smul.addr %s257, 2
        %s259 = scalar_lea.vmem [#allocation5], %s258
        %p260 = pneg %p101
        %p261 = pneg %p98
        %p262 = pneg %p129
        %p263 = pneg %p126
        %s264 = sand.u32 %s116, 1
        %s265 = scalar_lea.sflag [#allocation4], %s264
        %s266 = sand.u32 %s116, 1
        %s267 = smul.addr %s266, 4
        %s268 = scalar_lea.vmem [#allocation7], %s267
        %p269 = pneg %p157
        %p270 = pneg %p154
        %s271 = sand.u32 %s144, 1
        %s272 = scalar_lea.sflag [#allocation9], %s271
        %s273 = sand.u32 %s144, 1
        %s274 = smul.addr %s273, 4
        %s275 = scalar_lea.vmem [#allocation8], %s274
        %s276 = sadd.s32 %s33, %s34
        %s277 = sadd.s32 %s33, %s34
        %p278 = scmp.eq.s32.totalorder %s34, 0
        // Predicated region
        $region37: #{tpu_custom_call.1} parent=27 // pred_check
          %p279 = pneg %p278
        $region38: #{tpu_custom_call.1} parent=27 // pred_check_branch
          %281 = sbr.rel (%p279) target = $region40
        $region39: #{tpu_custom_call.1} parent=27 // pred_region
          %282 = vst [vmem:[%s268] sm:$0xf] 0.0
          %283 = vst [vmem:[%s275] sm:$0xf] 0.0
        $region40: #{tpu_custom_call.1} parent=27 // pred_fallthru
          _
        %v284 = vld [vmem:[%s232] sm:$0x3]
        %v285 = vld [vmem:[%s232 + $0x2] sm:$0x3]
        %v286 = vld [vmem:[%s232 + $0x4] sm:$0x3]
        %v287 = vld [vmem:[%s232 + $0x6] sm:$0x3]
        %vm288 = vcmask 1041408
        %v289 = vsel %vm288, %v284, -inf
        %v290 = vsel %vm288, %v285, -inf
        %v291 = vsel %vm288, %v286, -inf
        %v292 = vsel %vm288, %v287, -inf
        %v293 = vmax.f32 %v289, %v290
        %v294 = vmax.f32 %v291, %v292
        %v295 = vmax.f32 %v293, %v294
        %v296 = vsub.f32 %v284, %v295
        %v297 = vsub.f32 %v285, %v295
        %v298 = vsub.f32 %v286, %v295
        %v299 = vsub.f32 %v287, %v295
        %v300 = vmul.f32 %v296, 1.442695
        %v301 = vpow.pop %v300
        %v302 = vmul.f32 %v297, 1.442695
        %v303 = vpow.pop %v302
        %v304 = vmul.f32 %v298, 1.442695
        %v305 = vpow.pop %v304
        %v306 = vmul.f32 %v299, 1.442695
        %v307 = vpow.pop %v306
        %v308 = vsel %vm288, %v301, 0.0
        %v309 = vsel %vm288, %v303, 0.0
        %v310 = vadd.f32 %v308, %v309
        %v311 = vsel %vm288, %v305, 0.0
        %v312 = vadd.f32 %v310, %v311
        %v313 = vsel %vm288, %v307, 0.0
        %v314 = vadd.f32 %v312, %v313
        %v315 = vrcp.pop %v314
        %v316 = vmul.f32 %v314, %v315
        %v317 = vsub.f32 1.0, %v316
        %v318 = vmul.f32 %v315, %v317
        %v319 = vadd.f32 %v315, %v318
        %vm320 = vweird.f32 %v314
        %vm321 = vweird.f32 %v315
        %vm322 = vmor %vm320, %vm321
        %v323 = vsel %vm322, %v315, %v319
        %v324 = vand.u32 2147483647, %v314
        %vm325 = vcmp.eq.f32.partialorder %v324, 8.507059e+37
        %v326 = vand.u32 %v314, 2147483648
        %v327 = vor.u32 1.1754944e-38, %v326
        %v328 = vsel %vm325, %v327, %v323
        %v329 = vmul.f32 %v301, %v328
        %v330 = vmul.f32 %v303, %v328
        %v331 = vmul.f32 %v305, %v328
        %v332 = vmul.f32 %v307, %v328
        %v333 = vld [vmem:[%s242] sm:$0x3]
        %vm334 = vcmp.eq.s32.totalorder %v333, 0
        %vm335 = vcmp.eq.s32.totalorder %v333, 1
        %vm336 = vcmp.eq.s32.totalorder %v333, 2
        %vm337 = vcmp.eq.s32.totalorder %v333, 3
        %v338 = vld [vmem:[%s268] sm:$0xf]
        %v339 = vsel %vm334, %v329, 0.0
        %v340 = vsel %vm335, %v330, 0.0
        %v341 = vsel %vm336, %v331, 0.0
        %v342 = vsel %vm337, %v332, 0.0
        %v343 = vsel %vm288, %v339, 0.0
        %v344 = vrot.slane %v343, 4
        %v345 = vadd.f32 %v343, %v344
        %v346 = vrot.slane %v345, 2
        %v347 = vadd.f32 %v345, %v346
        %v348 = vrot.slane %v347, 1
        %v349 = vadd.f32 %v347, %v348
        %v350 = vsel %vm288, %v340, 0.0
        %v351 = vrot.slane %v350, 4
        %v352 = vadd.f32 %v350, %v351
        %v353 = vrot.slane %v352, 2
        %v354 = vadd.f32 %v352, %v353
        %v355 = vrot.slane %v354, 1
        %v356 = vadd.f32 %v354, %v355
        %v357 = vsel %vm288, %v341, 0.0
        %v358 = vrot.slane %v357, 4
        %v359 = vadd.f32 %v357, %v358
        %v360 = vrot.slane %v359, 2
        %v361 = vadd.f32 %v359, %v360
        %v362 = vrot.slane %v361, 1
        %v363 = vadd.f32 %v361, %v362
        %v364 = vsel %vm288, %v342, 0.0
        %v365 = vrot.slane %v364, 4
        %v366 = vadd.f32 %v364, %v365
        %v367 = vrot.slane %v366, 2
        %v368 = vadd.f32 %v366, %v367
        %v369 = vrot.slane %v368, 1
        %v370 = vadd.f32 %v368, %v369
        %vm375 = vcmask 1041409
        %v376 = vsel %vm375, %v356, %v349
        %vm377 = vcmask 1042434
        %v378 = vsel %vm377, %v363, %v376
        %vm379 = vcmask 1043459
        %v380 = vsel %vm379, %v370, %v378
        %v382 = vadd.f32 %v338, %v380
        %383 = vst [vmem:[%s268] sm:$0xf] %v382
        %v384 = vld [vmem:[%s275] sm:$0xf]
        %v385 = vsel %vm288, %v329, 0.0
        %v386 = vrot.slane %v385, 4
        %v387 = vadd.f32 %v385, %v386
        %v388 = vrot.slane %v387, 2
        %v389 = vadd.f32 %v387, %v388
        %v390 = vrot.slane %v389, 1
        %v391 = vadd.f32 %v389, %v390
        %v392 = vsel %vm288, %v330, 0.0
        %v393 = vrot.slane %v392, 4
        %v394 = vadd.f32 %v392, %v393
        %v395 = vrot.slane %v394, 2
        %v396 = vadd.f32 %v394, %v395
        %v397 = vrot.slane %v396, 1
        %v398 = vadd.f32 %v396, %v397
        %v399 = vsel %vm288, %v331, 0.0
        %v400 = vrot.slane %v399, 4
        %v401 = vadd.f32 %v399, %v400
        %v402 = vrot.slane %v401, 2
        %v403 = vadd.f32 %v401, %v402
        %v404 = vrot.slane %v403, 1
        %v405 = vadd.f32 %v403, %v404
        %v406 = vsel %vm288, %v332, 0.0
        %v407 = vrot.slane %v406, 4
        %v408 = vadd.f32 %v406, %v407
        %v409 = vrot.slane %v408, 2
        %v410 = vadd.f32 %v408, %v409
        %v411 = vrot.slane %v410, 1
        %v412 = vadd.f32 %v410, %v411
        %v417 = vsel %vm375, %v398, %v391
        %v418 = vsel %vm377, %v405, %v417
        %v419 = vsel %vm379, %v412, %v418
        %v421 = vadd.f32 %v384, %v419
        %422 = vst [vmem:[%s275] sm:$0xf] %v421
        %s423 = sand.u32 %s116, 1
        %s424 = scalar_lea.sflag [#allocation4], %s423
        %s425 = sand.u32 %s116, 1
        %s426 = smul.addr %s425, 4
        %s427 = scalar_lea.vmem [#allocation7], %s426
        %s428 = sand.u32 %s144, 1
        %s429 = scalar_lea.sflag [#allocation9], %s428
        %s430 = sand.u32 %s144, 1
        %s431 = smul.addr %s430, 4
        %s432 = scalar_lea.vmem [#allocation8], %s431
        // Predicated region
        $region41: #{tpu_custom_call.1} parent=27 // pred_check
          %p433 = pneg %p126
        $region42: #{tpu_custom_call.1} parent=27 // pred_check_branch
          %435 = sbr.rel (%p433) target = $region44
        $region43: #{tpu_custom_call.1} parent=27 // pred_region
          %437 = vsyncadd %s424, 0
          %s438 = sadd.s32 %s33, %s32
          %s439 = smul.addr %s438, 4
          %s440 = scalar_lea.hbm %s2, %s439
          %s442 = sshll.u32 %s427, 4
          %s443 = int_to_ptr.vmem [resolvable:$true] %s442
          %s444 = sshll.u32 %s440, 4
          %s445 = int_to_ptr.hbm [resolvable:$true] %s444
          %447 = dma.vmem_to_hbm [thread:$0]  %s443, 64, %s445, %s424
        $region44: #{tpu_custom_call.1} parent=27 // pred_fallthru
          _
        // Predicated region
        $region45: #{tpu_custom_call.1} parent=27 // pred_check
          %p448 = pneg %p154
        $region46: #{tpu_custom_call.1} parent=27 // pred_check_branch
          %450 = sbr.rel (%p448) target = $region48
        $region47: #{tpu_custom_call.1} parent=27 // pred_region
          %452 = vsyncadd %s429, 0
          %s453 = sadd.s32 %s33, %s32
          %s454 = smul.addr %s453, 4
          %s455 = scalar_lea.hbm %s3, %s454
          %s457 = sshll.u32 %s432, 4
          %s458 = int_to_ptr.vmem [resolvable:$true] %s457
          %s459 = sshll.u32 %s455, 4
          %s460 = int_to_ptr.hbm [resolvable:$true] %s459
          %462 = dma.vmem_to_hbm [thread:$0]  %s458, 64, %s460, %s429
        $region48: #{tpu_custom_call.1} parent=27 // pred_fallthru
          _
      $region28: #{tpu_custom_call.1} parent=5 // pred_fallthru
        _
      %p463 = scmp.le.s32.totalorder 2, %s22
      // Predicated region
      $region49: #{tpu_custom_call.1} parent=5 // pred_check
        %p464 = pneg %p463
      $region50: #{tpu_custom_call.1} parent=5 // pred_check_branch
        %466 = sbr.rel (%p464) target = $region52
      $region51: #{tpu_custom_call.1} parent=5 // pred_region
        %s467 = ssub.s32 %s22, 2
        // Predicated region
        $region53: #{tpu_custom_call.1} parent=51 // pred_check
          %p468 = pneg %p132
        $region54: #{tpu_custom_call.1} parent=51 // pred_check_branch
          %470 = sbr.rel (%p468) target = $region56
        $region55: #{tpu_custom_call.1} parent=51 // pred_region
          %s471 = sand.u32 %s117, 1
          %s472 = scalar_lea.sflag [#allocation4], %s471
          %s473 = sand.u32 %s117, 1
          %s474 = smul.addr %s473, 4
          %s475 = scalar_lea.vmem [#allocation7], %s474
          %477 = dma.done %s472, 64
        $region56: #{tpu_custom_call.1} parent=51 // pred_fallthru
          _
        // Predicated region
        $region57: #{tpu_custom_call.1} parent=51 // pred_check
          %p478 = pneg %p160
        $region58: #{tpu_custom_call.1} parent=51 // pred_check_branch
          %480 = sbr.rel (%p478) target = $region60
        $region59: #{tpu_custom_call.1} parent=51 // pred_region
          %s481 = sand.u32 %s145, 1
          %s482 = scalar_lea.sflag [#allocation9], %s481
          %s483 = sand.u32 %s145, 1
          %s484 = smul.addr %s483, 4
          %s485 = scalar_lea.vmem [#allocation8], %s484
          %487 = dma.done %s482, 64
        $region60: #{tpu_custom_call.1} parent=51 // pred_fallthru
          _
      $region52: #{tpu_custom_call.1} parent=5 // pred_fallthru
        _
    $region6: #{tpu_custom_call.1} parent=1 // loop_footer
      %s26 = sadd.s32 1, %s22
    $region7: #{tpu_custom_call.1} parent=1 // loop_footer_branch
      %21 = sbr.rel target = $region3
    $region8: #{tpu_custom_call.1} parent=1 // loop_exit
      _
    %488 = vsyncpa [#allocation3], 1
    %s489 = scalar_lea.sflag [#allocation3], 1
    %490 = vsyncpa %s489, 1
    %491 = vsyncpa [#allocation6], 1
    %s492 = scalar_lea.sflag [#allocation6], 1
    %493 = vsyncpa %s492, 1
    %494 = vsyncpa [#allocation4], 1
    %s495 = scalar_lea.sflag [#allocation4], 1
    %496 = vsyncpa %s495, 1
    %497 = vsyncpa [#allocation9], 1
    %s498 = scalar_lea.sflag [#allocation9], 1
    %499 = vsyncpa %s498, 1

</llo_original>
